<compile_context>
chip_gen: v7x
topology: tpu7x:2x2x1
jax: 0.10.0
libtpu: 0.0.40
codegen_flags: <defaults>
</compile_context>

<pallas_src>
import functools
import math

import jax
import jax.numpy as jnp
import numpy as np
from jax.experimental import pallas as pl
from jax.experimental.pallas import tpu as pltpu


# ----------------------------------------------------------------------------
# Buffer setup (plain JAX glue — matches torch __init__ exactly):
# sinusoidal_embedding_2d(32, 17, hidden_dim) as (real, imag) float32 planes.
# ----------------------------------------------------------------------------
def sinusoidal_embedding_2d(h, w, d):
    assert d % 2 == 0, "Dimension 'd' should be even."
    grid_h = jnp.arange(h // 2 - h, h // 2, dtype=jnp.float32)
    grid_w = jnp.arange(w, dtype=jnp.float32)
    div_term = jnp.power(10000.0, jnp.arange(0, d // 2, dtype=jnp.float32) / (d // 2))
    pos_h = grid_h[:, None] / div_term          # (h, d//2)
    pos_w = grid_w[:, None] / div_term          # (w, d//2)
    re = jnp.concatenate(
        [jnp.broadcast_to(jnp.cos(pos_h)[:, None, :], (h, w, d // 2)),
         jnp.broadcast_to(jnp.cos(pos_w)[None, :, :], (h, w, d // 2))], axis=-1)
    im = jnp.concatenate(
        [jnp.broadcast_to(jnp.sin(pos_h)[:, None, :], (h, w, d // 2)),
         jnp.broadcast_to(jnp.sin(pos_w)[None, :, :], (h, w, d // 2))], axis=-1)
    return re, im


# ----------------------------------------------------------------------------
# In-kernel helpers
# ----------------------------------------------------------------------------
def _atan2(y, x):
    """Branchless float32 atan2 from elementary VPU ops
    (Cephes-style minimax polynomial, ~1e-6 rad accuracy)."""
    abs_y = jnp.abs(y)
    abs_x = jnp.abs(x)
    num = jnp.minimum(abs_x, abs_y)
    den = jnp.maximum(abs_x, abs_y)
    t = num / jnp.where(den == 0.0, 1.0, den)            # t in [0, 1]
    hi = t > 0.4142135623730951                          # tan(pi/8)
    t2 = jnp.where(hi, (t - 1.0) / (t + 1.0), t)
    s = t2 * t2
    p = ((8.05374449538e-2 * s - 1.38776856032e-1) * s + 1.99777106478e-1) * s \
        - 3.33329491539e-1
    r = p * s * t2 + t2
    r = jnp.where(hi, r + 0.7853981633974483, r)         # atan(min/max) in [0, pi/4]
    r = jnp.where(abs_y > abs_x, 1.5707963267948966 - r, r)
    r = jnp.where(x < 0.0, jnp.float32(math.pi) - r, r)
    return jnp.where(y < 0.0, -r, r)


# ----------------------------------------------------------------------------
# Pallas kernels
# ----------------------------------------------------------------------------
def _add_pos_kernel(xr_ref, xi_ref, pr_ref, pi_ref, or_ref, oi_ref):
    """p == 0 fast path: exact complex add of the positional embedding."""
    or_ref[...] = xr_ref[...] + pr_ref[...]               # (TB, N) + (1, N)
    oi_ref[...] = xi_ref[...] + pi_ref[...]


def _pos_embed_dropout_kernel(xr_ref, xi_ref, pr_ref, pi_ref, bits_ref,
                              or_ref, oi_ref, *, p):
    """Complex add of positional embedding + spectral dropout (training)."""
    re = xr_ref[...] + pr_ref[...]                         # (TB, N), lane-dense
    im = xi_ref[...] + pi_ref[...]

    mag = jnp.sqrt(re * re + im * im)                      # |z|
    phase = _atan2(im, re)                                 # angle(z)

    # One shared random draw; low/high 16 bits give two independent masks.
    # torch F.dropout semantics: zero w.p. p, scale survivors by 1/(1-p).
    bits = bits_ref[...]
    thresh = jnp.uint32(int(round(p * 65536.0)))
    keep_scale = jnp.float32(1.0 / (1.0 - p))
    keep_mag = (bits & jnp.uint32(0xFFFF)) >= thresh
    keep_phase = (bits >> 16) >= thresh

    mag_d = jnp.where(keep_mag, mag * keep_scale, jnp.float32(0.0))
    phase_d = jnp.where(keep_phase, phase * keep_scale, jnp.float32(0.0))

    or_ref[...] = mag_d * jnp.cos(phase_d)
    oi_ref[...] = mag_d * jnp.sin(phase_d)


# ----------------------------------------------------------------------------
# Wrapper
# ----------------------------------------------------------------------------
def _pick_batch_block(batch, n):
    """Rows per grid step: aim ~2 MiB per f32 plane per block (keeps the
    double-buffered working set well inside the 32 MiB scoped VMEM default,
    including the smaller 64 MiB physical VMEM on v7x)."""
    bytes_per_row = n * 4
    rows = max(1, (2 * 1024 * 1024) // bytes_per_row)
    if rows >= batch:
        return batch                       # one block covers the whole batch
    return max(8, (rows // 8) * 8)         # (8, 128) sublane constraint


def positional_embedding_forward(x, pos_re_full, pos_im_full, *, p, seed):
    """x: complex64 (B, H, W, D); returns complex64 (B, H, W, D)."""
    B, H, W, D = x.shape
    N = H * W * D
    p = float(p)

    # Lane-dense planes: D alone may be < 128; H*W*D is a big multiple of 128.
    xr = jnp.real(x).astype(jnp.float32).reshape(B, N)
    xi = jnp.imag(x).astype(jnp.float32).reshape(B, N)
    pr = pos_re_full[:H, :W].reshape(1, N)
    pi = pos_im_full[:H, :W].reshape(1, N)

    TB = _pick_batch_block(B, N)
    grid = (pl.cdiv(B, TB),)

    x_spec = pl.BlockSpec((TB, N), lambda i: (i, 0))
    # pos is constant across the grid (index_map always (0, 0)); keeping the
    # default pipeline mode for interpret-mode portability.
    pos_spec = pl.BlockSpec((1, N), lambda i: (0, 0))
    out_spec = pl.BlockSpec((TB, N), lambda i: (i, 0))

    out_shape = (jax.ShapeDtypeStruct((B, N), jnp.float32),
                 jax.ShapeDtypeStruct((B, N), jnp.float32))
    cparams = pltpu.CompilerParams(dimension_semantics=("parallel",))

    if p == 0.0:
        # Eval / inference fast path: exact, no trig round trip.
        out_re, out_im = pl.pallas_call(
            _add_pos_kernel,
            out_shape=out_shape,
            grid=grid,
            in_specs=[x_spec, x_spec, pos_spec, pos_spec],
            out_specs=(out_spec, out_spec),
            compiler_params=cparams,
        )(xr, xi, pr, pi)
    else:
        # Host-side random bits (one uint32 plane, split in-kernel).
        bits = jax.random.bits(jax.random.PRNGKey(seed), (B, N), dtype=jnp.uint32)
        out_re, out_im = pl.pallas_call(
            functools.partial(_pos_embed_dropout_kernel, p=p),
            out_shape=out_shape,
            grid=grid,
            in_specs=[x_spec, x_spec, pos_spec, pos_spec, x_spec],
            out_specs=(out_spec, out_spec),
            compiler_params=cparams,
        )(xr, xi, pr, pi, bits)

    out = jax.lax.complex(out_re, out_im)                  # complex64
    return out.reshape(B, H, W, D)


# ----------------------------------------------------------------------------
# Demo / self-test
# ----------------------------------------------------------------------------
if __name__ == "__main__":
    B, H, W, D = 2, 8, 8, 32          # H <= 32, W <= 17 per the registered buffer
    dropout_p = 0.1

    key = jax.random.PRNGKey(0)
    k1, k2 = jax.random.split(key)
    x = jax.lax.complex(jax.random.normal(k1, (B, H, W, D), jnp.float32),
                        jax.random.normal(k2, (B, H, W, D), jnp.float32))

    # Buffer exactly as the torch module builds it: sinusoidal_embedding_2d(32, 17, D)
    pos_re, pos_im = sinusoidal_embedding_2d(32, 17, D)
    pos_c = jax.lax.complex(pos_re[:H, :W], pos_im[:H, :W])

    # p == 0: exact complex add (no mag/phase round trip).
    out0 = positional_embedding_forward(x, pos_re, pos_im, p=0.0, seed=0)
    ref0 = x + pos_c[None]
    np.testing.assert_allclose(np.asarray(out0), np.asarray(ref0), atol=1e-6, rtol=1e-6)

    # Dropout-enabled path (matches F.dropout(training=True) semantics);
    # compare against a pure-JAX reference using the same bits / masks.
    out = positional_embedding_forward(x, pos_re, pos_im, p=dropout_p, seed=1234)
    out = jax.block_until_ready(out)
    assert out.shape == (B, H, W, D) and out.dtype == jnp.complex64

    bits_ref = jax.random.bits(jax.random.PRNGKey(1234), (B, H * W * D),
                               dtype=jnp.uint32).reshape(B, H, W, D)
    thresh = np.uint32(round(dropout_p * 65536.0))
    keep_mag = (bits_ref & np.uint32(0xFFFF)) >= thresh
    keep_ph = (bits_ref >> 16) >= thresh
    z = x + pos_c[None]
    scale = jnp.float32(1.0 / (1.0 - dropout_p))
    mag_ref = jnp.where(keep_mag, jnp.abs(z) * scale, 0.0)
    ph_ref = jnp.where(keep_ph, jnp.angle(z) * scale, 0.0)
    ref = jax.lax.complex(mag_ref * jnp.cos(ph_ref), mag_ref * jnp.sin(ph_ref))
    np.testing.assert_allclose(np.asarray(out), np.asarray(ref), atol=2e-4, rtol=2e-4)
    assert bool(jnp.all(jnp.isfinite(jnp.abs(out))))

    print("KERNEL_OK")
</pallas_src>

<mosaic_0001>
module attributes {stable_mosaic.version = 11 : i64} {
  func.func @_add_pos_kernel(%arg0: i32, %arg1: memref<2x2048xf32, #tpu.memory_space<vmem>>, %arg2: memref<2x2048xf32, #tpu.memory_space<vmem>>, %arg3: memref<1x2048xf32, #tpu.memory_space<vmem>>, %arg4: memref<1x2048xf32, #tpu.memory_space<vmem>>, %arg5: memref<2x2048xf32, #tpu.memory_space<vmem>>, %arg6: memref<2x2048xf32, #tpu.memory_space<vmem>>) attributes {dimension_semantics = [#tpu.dimension_semantics<parallel>], iteration_bounds = array<i64: 1>, scalar_prefetch = 0 : i64, scratch_operands = 0 : i64, tpu.core_type = #tpu.core_type<tc>, window_params = [{transform_indices = @transform_0, window_bounds = array<i64: 2, 2048>}, {transform_indices = @transform_1, window_bounds = array<i64: 2, 2048>}, {pipeline_mode = #tpu.pipeline_mode<synchronous>, transform_indices = @transform_2, window_bounds = array<i64: 1, 2048>}, {pipeline_mode = #tpu.pipeline_mode<synchronous>, transform_indices = @transform_3, window_bounds = array<i64: 1, 2048>}, {transform_indices = @transform_4, window_bounds = array<i64: 2, 2048>}, {transform_indices = @transform_5, window_bounds = array<i64: 2, 2048>}]} {
    %c0 = arith.constant 0 : index
    %c0_0 = arith.constant 0 : index
    %0 = vector.load %arg1[%c0, %c0_0] : memref<2x2048xf32, #tpu.memory_space<vmem>>, vector<2x2048xf32>
    %c0_1 = arith.constant 0 : index
    %c0_2 = arith.constant 0 : index
    %1 = vector.load %arg3[%c0_1, %c0_2] : memref<1x2048xf32, #tpu.memory_space<vmem>>, vector<1x2048xf32>
    %2 = vector.broadcast %1 : vector<1x2048xf32> to vector<2x2048xf32>
    %3 = arith.addf %0, %2 : vector<2x2048xf32>
    %c0_3 = arith.constant 0 : index
    %c0_4 = arith.constant 0 : index
    %4 = vector.load %arg5[%c0_3, %c0_4] : memref<2x2048xf32, #tpu.memory_space<vmem>>, vector<2x2048xf32>
    tpu.vector_store %arg5[%c0_3, %c0_4], %3 {strides = array<i32>} : memref<2x2048xf32, #tpu.memory_space<vmem>>, vector<2x2048xf32>,
    %c0_5 = arith.constant 0 : index
    %c0_6 = arith.constant 0 : index
    %5 = vector.load %arg2[%c0_5, %c0_6] : memref<2x2048xf32, #tpu.memory_space<vmem>>, vector<2x2048xf32>
    %c0_7 = arith.constant 0 : index
    %c0_8 = arith.constant 0 : index
    %6 = vector.load %arg4[%c0_7, %c0_8] : memref<1x2048xf32, #tpu.memory_space<vmem>>, vector<1x2048xf32>
    %7 = vector.broadcast %6 : vector<1x2048xf32> to vector<2x2048xf32>
    %8 = arith.addf %5, %7 : vector<2x2048xf32>
    %c0_9 = arith.constant 0 : index
    %c0_10 = arith.constant 0 : index
    %9 = vector.load %arg6[%c0_9, %c0_10] : memref<2x2048xf32, #tpu.memory_space<vmem>>, vector<2x2048xf32>
    tpu.vector_store %arg6[%c0_9, %c0_10], %8 {strides = array<i32>} : memref<2x2048xf32, #tpu.memory_space<vmem>>, vector<2x2048xf32>,
    return
  }
  func.func @transform_0(%arg0: i32) -> (i32, i32) {
    %c0_i32 = arith.constant 0 : i32
    %c0_i32_0 = arith.constant 0 : i32
    return %arg0, %c0_i32 : i32, i32
  }
  func.func @transform_1(%arg0: i32) -> (i32, i32) {
    %c0_i32 = arith.constant 0 : i32
    %c0_i32_0 = arith.constant 0 : i32
    return %arg0, %c0_i32 : i32, i32
  }
  func.func @transform_2(%arg0: i32) -> (i32, i32) {
    %c0_i32 = arith.constant 0 : i32
    %c0_i32_0 = arith.constant 0 : i32
    %c0_i32_1 = arith.constant 0 : i32
    return %c0_i32, %c0_i32_0 : i32, i32
  }
  func.func @transform_3(%arg0: i32) -> (i32, i32) {
    %c0_i32 = arith.constant 0 : i32
    %c0_i32_0 = arith.constant 0 : i32
    %c0_i32_1 = arith.constant 0 : i32
    return %c0_i32, %c0_i32_0 : i32, i32
  }
  func.func @transform_4(%arg0: i32) -> (i32, i32) {
    %c0_i32 = arith.constant 0 : i32
    %c0_i32_0 = arith.constant 0 : i32
    return %arg0, %c0_i32 : i32, i32
  }
  func.func @transform_5(%arg0: i32) -> (i32, i32) {
    %c0_i32 = arith.constant 0 : i32
    %c0_i32_0 = arith.constant 0 : i32
    return %arg0, %c0_i32 : i32, i32
  }
}

</mosaic_0001>

<llo_original>
// kernel: tpu_custom_call.1
$region0: #{tpu_custom_call.1}
  #allocation0 [shape = 'u32[]', space=smem, size = 0x4, offset = 0x4, fixed_abs, tag = 'smem constant byte address 0x4 - core index']
  #allocation1 [shape = 'u32[144,128]{1,0:T(1,128)}', space=vmem, size = 0x12000, scoped, tag = 'internal scratch']
  %s0 = inlined_call_operand.hbm [shape: f32[2,2048], index: 0, kind: input, shape index: {}]
  %s1 = inlined_call_operand.hbm [shape: f32[2,2048], index: 1, kind: input, shape index: {}]
  %s2 = inlined_call_operand.hbm [shape: f32[1,2048], index: 2, kind: input, shape index: {}]
  %s3 = inlined_call_operand.hbm [shape: f32[1,2048], index: 3, kind: input, shape index: {}]
  %s4 = inlined_call_operand.hbm [shape: f32[2,2048], index: 4, kind: output, shape index: {0}]
  %s5 = inlined_call_operand.hbm [shape: f32[2,2048], index: 5, kind: output, shape index: {1}]
  %6 = xla_tuple %s4, %s5
  %s7 = sld [smem:[#allocation0]]
  $region50: #{tpu_custom_call.1} parent=0
    _
  %s9 = ssub.s32 1, %s7
  %s10 = scalar_select 0, %s9, %s7
  $region1: #{tpu_custom_call.1} parent=0
    #allocation2 [shape = 'u8[16384]{0}', space=vmem, size = 0x4000, scoped, tag = 'input window, operand 0, single buffered']
    #allocation3 [shape = 's32[1]{0}', space=sflag, size = 0x4, scoped, tag = 'scoped memory for tpu_custom_call.1']
    #allocation4 [shape = 's32[1]{0}', space=sflag, size = 0x4, scoped, tag = 'scoped memory for tpu_custom_call.1']
    #allocation5 [shape = 'u8[16384]{0}', space=vmem, size = 0x4000, scoped, tag = 'input window, operand 1, single buffered']
    #allocation6 [shape = 's32[1]{0}', space=sflag, size = 0x4, scoped, tag = 'scoped memory for tpu_custom_call.1']
    #allocation7 [shape = 'u8[8192]{0}', space=vmem, size = 0x2000, scoped, tag = 'input window, operand 2, single buffered']
    #allocation8 [shape = 'u8[8192]{0}', space=vmem, size = 0x2000, scoped, tag = 'input window, operand 3, single buffered']
    #allocation9 [shape = 's32[1]{0}', space=sflag, size = 0x4, scoped, tag = 'scoped memory for tpu_custom_call.1']
    #allocation10 [shape = 'u8[16384]{0}', space=vmem, size = 0x4000, scoped, tag = 'output window, operand 0, single buffered']
    #allocation11 [shape = 'u8[16384]{0}', space=vmem, size = 0x4000, scoped, tag = 'output window, operand 1, single buffered']
    #allocation12 [shape = 's32[1]{0}', space=sflag, size = 0x4, scoped, tag = 'scoped memory for tpu_custom_call.1']
    %11 = vsyncpa [#allocation3], 0
    %12 = vsyncpa [#allocation6], 0
    %13 = vsyncpa [#allocation9], 0
    %14 = vsyncpa [#allocation4], 0
    %15 = vsyncpa [#allocation12], 0
    // Predicated region
    $region2: #{tpu_custom_call.1} parent=1 // pred_check
      _
    $region3: #{tpu_custom_call.1} parent=1 // pred_check_branch
      %17 = sbr.rel (0) target = $region5
    $region4: #{tpu_custom_call.1} parent=1 // pred_region
      %s19 = ssub.s32 512, 512
      %20 = vsyncadd [#allocation3], %s19
      %s22 = sshll.u32 [#allocation2], 4
      %s23 = int_to_ptr.vmem [resolvable:$true] %s22
      %25 = dma.hbm_to_vmem [thread:$0]  %s0, 512, %s23, [#allocation3]
    $region5: #{tpu_custom_call.1} parent=1 // pred_fallthru
      _
    // Predicated region
    $region6: #{tpu_custom_call.1} parent=1 // pred_check
      _
    $region7: #{tpu_custom_call.1} parent=1 // pred_check_branch
      %27 = sbr.rel (0) target = $region9
    $region8: #{tpu_custom_call.1} parent=1 // pred_region
      %s29 = ssub.s32 512, 512
      %30 = vsyncadd [#allocation6], %s29
      %s32 = sshll.u32 [#allocation5], 4
      %s33 = int_to_ptr.vmem [resolvable:$true] %s32
      %35 = dma.hbm_to_vmem [thread:$0]  %s1, 512, %s33, [#allocation6]
    $region9: #{tpu_custom_call.1} parent=1 // pred_fallthru
      _
    // Predicated region
    $region10: #{tpu_custom_call.1} parent=1 // pred_check
      _
    $region11: #{tpu_custom_call.1} parent=1 // pred_check_branch
      %37 = sbr.rel (0) target = $region13
    $region12: #{tpu_custom_call.1} parent=1 // pred_region
      %s39 = ssub.s32 256, 256
      %40 = vsyncadd [#allocation6], %s39
      %s42 = sshll.u32 [#allocation7], 4
      %s43 = int_to_ptr.vmem [resolvable:$true] %s42
      %45 = dma.hbm_to_vmem [thread:$0]  %s2, 256, %s43, [#allocation6]
    $region13: #{tpu_custom_call.1} parent=1 // pred_fallthru
      _
    // Predicated region
    $region14: #{tpu_custom_call.1} parent=1 // pred_check
      _
    $region15: #{tpu_custom_call.1} parent=1 // pred_check_branch
      %47 = sbr.rel (0) target = $region17
    $region16: #{tpu_custom_call.1} parent=1 // pred_region
      %s49 = ssub.s32 256, 256
      %50 = vsyncadd [#allocation9], %s49
      %s52 = sshll.u32 [#allocation8], 4
      %s53 = int_to_ptr.vmem [resolvable:$true] %s52
      %55 = dma.hbm_to_vmem [thread:$0]  %s3, 256, %s53, [#allocation9]
    $region17: #{tpu_custom_call.1} parent=1 // pred_fallthru
      _
    // Predicated region
    $region18: #{tpu_custom_call.1} parent=1 // pred_check
      _
    $region19: #{tpu_custom_call.1} parent=1 // pred_check_branch
      %57 = sbr.rel (0) target = $region21
    $region20: #{tpu_custom_call.1} parent=1 // pred_region
      %58 = dma.done [#allocation3], 512
    $region21: #{tpu_custom_call.1} parent=1 // pred_fallthru
      _
    // Predicated region
    $region22: #{tpu_custom_call.1} parent=1 // pred_check
      _
    $region23: #{tpu_custom_call.1} parent=1 // pred_check_branch
      %60 = sbr.rel (0) target = $region25
    $region24: #{tpu_custom_call.1} parent=1 // pred_region
      %61 = dma.done [#allocation6], 512
    $region25: #{tpu_custom_call.1} parent=1 // pred_fallthru
      _
    // Predicated region
    $region26: #{tpu_custom_call.1} parent=1 // pred_check
      _
    $region27: #{tpu_custom_call.1} parent=1 // pred_check_branch
      %63 = sbr.rel (0) target = $region29
    $region28: #{tpu_custom_call.1} parent=1 // pred_region
      %64 = dma.done [#allocation6], 256
    $region29: #{tpu_custom_call.1} parent=1 // pred_fallthru
      _
    // Predicated region
    $region30: #{tpu_custom_call.1} parent=1 // pred_check
      _
    $region31: #{tpu_custom_call.1} parent=1 // pred_check_branch
      %66 = sbr.rel (0) target = $region33
    $region32: #{tpu_custom_call.1} parent=1 // pred_region
      %67 = dma.done [#allocation9], 256
    $region33: #{tpu_custom_call.1} parent=1 // pred_fallthru
      _
    %v68 = vld [vmem:[#allocation2] sm:$0xff]
    %v69 = vld [vmem:[#allocation2 + $0x8] sm:$0xff]
    %v70 = vld [vmem:[#allocation2 + $0x10] sm:$0xff]
    %v71 = vld [vmem:[#allocation2 + $0x18] sm:$0xff]
    %v72 = vld [vmem:[#allocation7] sm:$0xff]
    %v73 = vld [vmem:[#allocation7 + $0x8] sm:$0xff]
    %v76 = vlaneseq
    %v77 = vshrl.u32 %v76, 7
    %v78 = vsub.s32 0, %v77
    %v79 = vrot.slane %v72, %v78
    %v80 = vlaneseq
    %v81 = vshrl.u32 %v80, 7
    %v82 = vsub.s32 1, %v81
    %v83 = vrot.slane %v72, %v82
    %v84 = vlaneseq
    %v85 = vshrl.u32 %v84, 7
    %v86 = vsub.s32 2, %v85
    %v87 = vrot.slane %v72, %v86
    %v88 = vlaneseq
    %v89 = vshrl.u32 %v88, 7
    %v90 = vsub.s32 3, %v89
    %v91 = vrot.slane %v72, %v90
    %v92 = vlaneseq
    %v93 = vshrl.u32 %v92, 7
    %v94 = vsub.s32 4, %v93
    %v95 = vrot.slane %v72, %v94
    %v96 = vlaneseq
    %v97 = vshrl.u32 %v96, 7
    %v98 = vsub.s32 5, %v97
    %v99 = vrot.slane %v72, %v98
    %v100 = vlaneseq
    %v101 = vshrl.u32 %v100, 7
    %v102 = vsub.s32 6, %v101
    %v103 = vrot.slane %v72, %v102
    %v104 = vlaneseq
    %v105 = vshrl.u32 %v104, 7
    %v106 = vsub.s32 7, %v105
    %v107 = vrot.slane %v72, %v106
    %v108 = vlaneseq
    %v109 = vshrl.u32 %v108, 7
    %v110 = vsub.s32 0, %v109
    %v111 = vrot.slane %v73, %v110
    %v112 = vlaneseq
    %v113 = vshrl.u32 %v112, 7
    %v114 = vsub.s32 1, %v113
    %v115 = vrot.slane %v73, %v114
    %v116 = vlaneseq
    %v117 = vshrl.u32 %v116, 7
    %v118 = vsub.s32 2, %v117
    %v119 = vrot.slane %v73, %v118
    %v120 = vlaneseq
    %v121 = vshrl.u32 %v120, 7
    %v122 = vsub.s32 3, %v121
    %v123 = vrot.slane %v73, %v122
    %v124 = vlaneseq
    %v125 = vshrl.u32 %v124, 7
    %v126 = vsub.s32 4, %v125
    %v127 = vrot.slane %v73, %v126
    %v128 = vlaneseq
    %v129 = vshrl.u32 %v128, 7
    %v130 = vsub.s32 5, %v129
    %v131 = vrot.slane %v73, %v130
    %v132 = vlaneseq
    %v133 = vshrl.u32 %v132, 7
    %v134 = vsub.s32 6, %v133
    %v135 = vrot.slane %v73, %v134
    %v136 = vlaneseq
    %v137 = vshrl.u32 %v136, 7
    %v138 = vsub.s32 7, %v137
    %v139 = vrot.slane %v73, %v138
    %v140 = vcombine.low %v79, %v83
    %v141 = vcombine.low %v87, %v91
    %v143 = vunpack.c.l.s4 1983009808
    %v144 = vunpack.c.0.s8 %v143
    %v145 = vlaneseq
    %v146 = vshrl.u32 %v145, 7
    %v147 = vsub.s32 %v144, %v146
    %v148 = vrot.slane %v140, %v147
    %v150 = vunpack.c.l.s4 1983009808
    %v151 = vunpack.c.0.s8 %v150
    %v152 = vlaneseq
    %v153 = vshrl.u32 %v152, 7
    %v154 = vsub.s32 %v151, %v153
    %v155 = vrot.slane %v141, %v154
    %v156 = vcombine.low %v148, %v155
    %v157 = vcombine.low %v95, %v99
    %v158 = vcombine.low %v103, %v107
    %v160 = vunpack.c.l.s4 1983009808
    %v161 = vunpack.c.0.s8 %v160
    %v162 = vlaneseq
    %v163 = vshrl.u32 %v162, 7
    %v164 = vsub.s32 %v161, %v163
    %v165 = vrot.slane %v157, %v164
    %v167 = vunpack.c.l.s4 1983009808
    %v168 = vunpack.c.0.s8 %v167
    %v169 = vlaneseq
    %v170 = vshrl.u32 %v169, 7
    %v171 = vsub.s32 %v168, %v170
    %v172 = vrot.slane %v158, %v171
    %v173 = vcombine.low %v165, %v172
    %v174 = vcombine.low %v111, %v115
    %v175 = vcombine.low %v119, %v123
    %v177 = vunpack.c.l.s4 1983009808
    %v178 = vunpack.c.0.s8 %v177
    %v179 = vlaneseq
    %v180 = vshrl.u32 %v179, 7
    %v181 = vsub.s32 %v178, %v180
    %v182 = vrot.slane %v174, %v181
    %v184 = vunpack.c.l.s4 1983009808
    %v185 = vunpack.c.0.s8 %v184
    %v186 = vlaneseq
    %v187 = vshrl.u32 %v186, 7
    %v188 = vsub.s32 %v185, %v187
    %v189 = vrot.slane %v175, %v188
    %v190 = vcombine.low %v182, %v189
    %v191 = vcombine.low %v127, %v131
    %v192 = vcombine.low %v135, %v139
    %v194 = vunpack.c.l.s4 1983009808
    %v195 = vunpack.c.0.s8 %v194
    %v196 = vlaneseq
    %v197 = vshrl.u32 %v196, 7
    %v198 = vsub.s32 %v195, %v197
    %v199 = vrot.slane %v191, %v198
    %v201 = vunpack.c.l.s4 1983009808
    %v202 = vunpack.c.0.s8 %v201
    %v203 = vlaneseq
    %v204 = vshrl.u32 %v203, 7
    %v205 = vsub.s32 %v202, %v204
    %v206 = vrot.slane %v192, %v205
    %v207 = vcombine.low %v199, %v206
    %v212 = vadd.f32 %v68, %v156
    %v213 = vadd.f32 %v69, %v173
    %v214 = vadd.f32 %v70, %v190
    %v215 = vadd.f32 %v71, %v207
    %216 = vst [vmem:[#allocation10] sm:$0xff] %v212
    %217 = vst [vmem:[#allocation10 + $0x8] sm:$0xff] %v213
    %218 = vst [vmem:[#allocation10 + $0x10] sm:$0xff] %v214
    %219 = vst [vmem:[#allocation10 + $0x18] sm:$0xff] %v215
    %v220 = vld [vmem:[#allocation5] sm:$0xff]
    %v221 = vld [vmem:[#allocation5 + $0x8] sm:$0xff]
    %v222 = vld [vmem:[#allocation5 + $0x10] sm:$0xff]
    %v223 = vld [vmem:[#allocation5 + $0x18] sm:$0xff]
    %v224 = vld [vmem:[#allocation8] sm:$0xff]
    %v225 = vld [vmem:[#allocation8 + $0x8] sm:$0xff]
    %v228 = vlaneseq
    %v229 = vshrl.u32 %v228, 7
    %v230 = vsub.s32 0, %v229
    %v231 = vrot.slane %v224, %v230
    %v232 = vlaneseq
    %v233 = vshrl.u32 %v232, 7
    %v234 = vsub.s32 1, %v233
    %v235 = vrot.slane %v224, %v234
    %v236 = vlaneseq
    %v237 = vshrl.u32 %v236, 7
    %v238 = vsub.s32 2, %v237
    %v239 = vrot.slane %v224, %v238
    %v240 = vlaneseq
    %v241 = vshrl.u32 %v240, 7
    %v242 = vsub.s32 3, %v241
    %v243 = vrot.slane %v224, %v242
    %v244 = vlaneseq
    %v245 = vshrl.u32 %v244, 7
    %v246 = vsub.s32 4, %v245
    %v247 = vrot.slane %v224, %v246
    %v248 = vlaneseq
    %v249 = vshrl.u32 %v248, 7
    %v250 = vsub.s32 5, %v249
    %v251 = vrot.slane %v224, %v250
    %v252 = vlaneseq
    %v253 = vshrl.u32 %v252, 7
    %v254 = vsub.s32 6, %v253
    %v255 = vrot.slane %v224, %v254
    %v256 = vlaneseq
    %v257 = vshrl.u32 %v256, 7
    %v258 = vsub.s32 7, %v257
    %v259 = vrot.slane %v224, %v258
    %v260 = vlaneseq
    %v261 = vshrl.u32 %v260, 7
    %v262 = vsub.s32 0, %v261
    %v263 = vrot.slane %v225, %v262
    %v264 = vlaneseq
    %v265 = vshrl.u32 %v264, 7
    %v266 = vsub.s32 1, %v265
    %v267 = vrot.slane %v225, %v266
    %v268 = vlaneseq
    %v269 = vshrl.u32 %v268, 7
    %v270 = vsub.s32 2, %v269
    %v271 = vrot.slane %v225, %v270
    %v272 = vlaneseq
    %v273 = vshrl.u32 %v272, 7
    %v274 = vsub.s32 3, %v273
    %v275 = vrot.slane %v225, %v274
    %v276 = vlaneseq
    %v277 = vshrl.u32 %v276, 7
    %v278 = vsub.s32 4, %v277
    %v279 = vrot.slane %v225, %v278
    %v280 = vlaneseq
    %v281 = vshrl.u32 %v280, 7
    %v282 = vsub.s32 5, %v281
    %v283 = vrot.slane %v225, %v282
    %v284 = vlaneseq
    %v285 = vshrl.u32 %v284, 7
    %v286 = vsub.s32 6, %v285
    %v287 = vrot.slane %v225, %v286
    %v288 = vlaneseq
    %v289 = vshrl.u32 %v288, 7
    %v290 = vsub.s32 7, %v289
    %v291 = vrot.slane %v225, %v290
    %v292 = vcombine.low %v231, %v235
    %v293 = vcombine.low %v239, %v243
    %v295 = vunpack.c.l.s4 1983009808
    %v296 = vunpack.c.0.s8 %v295
    %v297 = vlaneseq
    %v298 = vshrl.u32 %v297, 7
    %v299 = vsub.s32 %v296, %v298
    %v300 = vrot.slane %v292, %v299
    %v302 = vunpack.c.l.s4 1983009808
    %v303 = vunpack.c.0.s8 %v302
    %v304 = vlaneseq
    %v305 = vshrl.u32 %v304, 7
    %v306 = vsub.s32 %v303, %v305
    %v307 = vrot.slane %v293, %v306
    %v308 = vcombine.low %v300, %v307
    %v309 = vcombine.low %v247, %v251
    %v310 = vcombine.low %v255, %v259
    %v312 = vunpack.c.l.s4 1983009808
    %v313 = vunpack.c.0.s8 %v312
    %v314 = vlaneseq
    %v315 = vshrl.u32 %v314, 7
    %v316 = vsub.s32 %v313, %v315
    %v317 = vrot.slane %v309, %v316
    %v319 = vunpack.c.l.s4 1983009808
    %v320 = vunpack.c.0.s8 %v319
    %v321 = vlaneseq
    %v322 = vshrl.u32 %v321, 7
    %v323 = vsub.s32 %v320, %v322
    %v324 = vrot.slane %v310, %v323
    %v325 = vcombine.low %v317, %v324
    %v326 = vcombine.low %v263, %v267
    %v327 = vcombine.low %v271, %v275
    %v329 = vunpack.c.l.s4 1983009808
    %v330 = vunpack.c.0.s8 %v329
    %v331 = vlaneseq
    %v332 = vshrl.u32 %v331, 7
    %v333 = vsub.s32 %v330, %v332
    %v334 = vrot.slane %v326, %v333
    %v336 = vunpack.c.l.s4 1983009808
    %v337 = vunpack.c.0.s8 %v336
    %v338 = vlaneseq
    %v339 = vshrl.u32 %v338, 7
    %v340 = vsub.s32 %v337, %v339
    %v341 = vrot.slane %v327, %v340
    %v342 = vcombine.low %v334, %v341
    %v343 = vcombine.low %v279, %v283
    %v344 = vcombine.low %v287, %v291
    %v346 = vunpack.c.l.s4 1983009808
    %v347 = vunpack.c.0.s8 %v346
    %v348 = vlaneseq
    %v349 = vshrl.u32 %v348, 7
    %v350 = vsub.s32 %v347, %v349
    %v351 = vrot.slane %v343, %v350
    %v353 = vunpack.c.l.s4 1983009808
    %v354 = vunpack.c.0.s8 %v353
    %v355 = vlaneseq
    %v356 = vshrl.u32 %v355, 7
    %v357 = vsub.s32 %v354, %v356
    %v358 = vrot.slane %v344, %v357
    %v359 = vcombine.low %v351, %v358
    %v364 = vadd.f32 %v220, %v308
    %v365 = vadd.f32 %v221, %v325
    %v366 = vadd.f32 %v222, %v342
    %v367 = vadd.f32 %v223, %v359
    %368 = vst [vmem:[#allocation11] sm:$0xff] %v364
    %369 = vst [vmem:[#allocation11 + $0x8] sm:$0xff] %v365
    %370 = vst [vmem:[#allocation11 + $0x10] sm:$0xff] %v366
    %371 = vst [vmem:[#allocation11 + $0x18] sm:$0xff] %v367
    // Predicated region
    $region34: #{tpu_custom_call.1} parent=1 // pred_check
      _
    $region35: #{tpu_custom_call.1} parent=1 // pred_check_branch
      %373 = sbr.rel (0) target = $region37
    $region36: #{tpu_custom_call.1} parent=1 // pred_region
      %s375 = ssub.s32 512, 512
      %376 = vsyncadd [#allocation4], %s375
      %s378 = sshll.u32 [#allocation10], 4
      %s379 = int_to_ptr.vmem [resolvable:$true] %s378
      %381 = dma.vmem_to_hbm [thread:$0]  %s379, 512, %s4, [#allocation4]
    $region37: #{tpu_custom_call.1} parent=1 // pred_fallthru
      _
    // Predicated region
    $region38: #{tpu_custom_call.1} parent=1 // pred_check
      _
    $region39: #{tpu_custom_call.1} parent=1 // pred_check_branch
      %383 = sbr.rel (0) target = $region41
    $region40: #{tpu_custom_call.1} parent=1 // pred_region
      %s385 = ssub.s32 512, 512
      %386 = vsyncadd [#allocation12], %s385
      %s388 = sshll.u32 [#allocation11], 4
      %s389 = int_to_ptr.vmem [resolvable:$true] %s388
      %391 = dma.vmem_to_hbm [thread:$0]  %s389, 512, %s5, [#allocation12]
    $region41: #{tpu_custom_call.1} parent=1 // pred_fallthru
      _
    // Predicated region
    $region42: #{tpu_custom_call.1} parent=1 // pred_check
      _
    $region43: #{tpu_custom_call.1} parent=1 // pred_check_branch
      %393 = sbr.rel (0) target = $region45
    $region44: #{tpu_custom_call.1} parent=1 // pred_region
      %394 = dma.done [#allocation4], 512
    $region45: #{tpu_custom_call.1} parent=1 // pred_fallthru
      _
    // Predicated region
    $region46: #{tpu_custom_call.1} parent=1 // pred_check
      _
    $region47: #{tpu_custom_call.1} parent=1 // pred_check_branch
      %396 = sbr.rel (0) target = $region49
    $region48: #{tpu_custom_call.1} parent=1 // pred_region
      %397 = dma.done [#allocation12], 512
    $region49: #{tpu_custom_call.1} parent=1 // pred_fallthru
      _
    %398 = vsyncpa [#allocation3], 1
    %399 = vsyncpa [#allocation6], 1
    %400 = vsyncpa [#allocation9], 1
    %401 = vsyncpa [#allocation4], 1
    %402 = vsyncpa [#allocation12], 1

</llo_original>
